<compile_context>
chip_gen: v5e
topology: v5e:2x2
jax: 0.10.0
libtpu: 0.0.40
codegen_flags: <defaults>
</compile_context>

<pallas_src>
import math

import jax
import jax.numpy as jnp
from jax.experimental import pallas as pl
from jax.experimental.pallas import tpu as pltpu


def _cdiv(a, b):
    return (a + b - 1) // b


def _round_up(x, m):
    return _cdiv(x, m) * m


def _make_attention_kernel(num_views):
    def kernel(wbd_ref, exp_ref, *refs):
        # wbd_ref: (L, g) block-diagonal projection weight (input dtype)
        # exp_ref: (g, L) 0/1 expansion matrix (f32)
        # refs[:K]: K lane-packed input blocks, each (tile, L), native dtype
        # refs[K]:  output block (tile, L)
        xs = [refs[k][...] for k in range(num_views)]
        o_ref = refs[num_views]
        wbd = wbd_ref[...]
        expand = exp_ref[...]

        # Per-row logits for every view on the MXU:
        # (tile, L=g*C) @ (L, g) -> (tile, g) f32; element [i, j] is the
        # logit of original row i*g + j for this view.
        logits = [
            jnp.dot(x, wbd, preferred_element_type=jnp.float32) for x in xs
        ]

        # Numerically stable softmax over the K views, unrolled (K is small);
        # everything is elementwise on (tile, g) tiles -- no cross-lane work.
        m = logits[0]
        for l in logits[1:]:
            m = jnp.maximum(m, l)
        es = [jnp.exp(l - m) for l in logits]
        denom = es[0]
        for e in es[1:]:
            denom = denom + e
        inv = pl.reciprocal(denom)              # exact; kernel is HBM-bound
        ps = [e * inv for e in es]              # (tile, g) f32, sums to 1

        # Expand each per-(row, view) weight back to the lane-dense layout
        # with a 0/1 matmul (MXU) and accumulate the weighted sum in f32.
        acc = xs[0] * jnp.dot(ps[0], expand, preferred_element_type=jnp.float32)
        for x, p in zip(xs[1:], ps[1:]):
            acc = acc + x * jnp.dot(p, expand,
                                    preferred_element_type=jnp.float32)
        o_ref[...] = acc.astype(o_ref.dtype)

    return kernel


def _choose_tile_rows(num_rows, num_views, lanes, itemsize):
    """Packed rows per grid step, sized for v7x VMEM and megacore split."""
    # Double-buffered (K inputs + 1 output) streams should stay <= ~32 MiB
    # (well under v7x's 64 MiB/TC, exploitable further on v6e if desired).
    stream_budget = 32 * 1024 * 1024
    per_row = 2 * (num_views + 1) * lanes * itemsize
    t = max(8, min(4096, stream_budget // per_row))
    # Prefer >= 4 grid steps so ("parallel",) actually splits work across the
    # two v7x TensorCores and the pipeline has depth, but never shrink below
    # 1024 packed rows (per-step fixed cost ~0.35 us).
    t = min(t, max(1024, _round_up(_cdiv(num_rows, 4), 8)))
    t = max(8, (t // 8) * 8)
    if num_rows <= t:
        return num_rows     # single block; block dim == full array dim is legal
    return t


def attention_forward(inputs, weight, bias=None, *, tile_rows=None):
    """inputs: list of K (N, C) arrays; weight: (1, C); bias: (1,). -> (N, C).

    `bias` is accepted for API parity with nn.Linear but unused: softmax over
    the K views is shift-invariant, so a common bias on every view's logit
    cannot change the output.
    """
    del bias
    K = len(inputs)
    N, C = inputs[0].shape
    dtype = inputs[0].dtype
    itemsize = jnp.dtype(dtype).itemsize

    # Lane-dense packing: group g consecutive rows so the packed last dim
    # L = g*C is a multiple of 128 lanes.  Row-major (N, C) -> (N/g, L) is a
    # free reshape (no HBM copy).
    g = math.lcm(C, 128) // C
    n_pad = _round_up(N, g)
    if n_pad != N:
        # Minimal (< g rows) alignment pad, only when N % g != 0.
        inputs = [jnp.pad(x, ((0, n_pad - N), (0, 0))) for x in inputs]
    L = g * C
    R = n_pad // g
    packed = [x.reshape(R, L) for x in inputs]

    # Host-built matrices:
    #   expand[j, j*C:(j+1)*C] = 1        (g, L)  -- 0/1 expansion
    #   wbd[j*C + c, j]        = w[c]     (L, g)  -- block-diagonal Linear
    w = weight.reshape(C).astype(jnp.float32)
    expand = jnp.kron(jnp.eye(g, dtype=jnp.float32),
                      jnp.ones((1, C), dtype=jnp.float32))           # (g, L)
    wbd = (expand * jnp.tile(w, (g,))[None, :]).T.astype(dtype)       # (L, g)

    if tile_rows is None:
        tile_rows = _choose_tile_rows(R, K, L, itemsize)
    else:
        tile_rows = min(max(8, (tile_rows // 8) * 8), _round_up(R, 8))
    grid = (_cdiv(R, tile_rows),)

    x_spec = pl.BlockSpec((tile_rows, L), lambda i: (i, 0))
    in_specs = (
        [pl.BlockSpec((L, g), lambda i: (0, 0)),      # block-diagonal weight
         pl.BlockSpec((g, L), lambda i: (0, 0))]      # 0/1 expansion matrix
        + [x_spec] * K
    )

    # VMEM limit from the actual double-buffered stream footprint + headroom
    # for Mosaic temporaries; capped so it is always v7x-safe.
    stream_bytes = 2 * (K + 1) * tile_rows * L * itemsize
    vmem_limit = int(min(stream_bytes * 1.5 + (16 << 20), 56 << 20))

    cost = pl.CostEstimate(
        flops=2 * n_pad * K * C              # logit projection
        + 2 * R * K * g * L                  # weight expansion matmul
        + 3 * n_pad * K * C,                 # weighted sum
        transcendentals=n_pad * K,
        bytes_accessed=(K + 1) * n_pad * C * itemsize + 8 * L * g,
    )

    out = pl.pallas_call(
        _make_attention_kernel(K),
        out_shape=jax.ShapeDtypeStruct((R, L), dtype),
        grid_spec=pltpu.PrefetchScalarGridSpec(
            num_scalar_prefetch=0,
            grid=grid,
            in_specs=in_specs,
            out_specs=pl.BlockSpec((tile_rows, L), lambda i: (i, 0)),
        ),
        compiler_params=pltpu.CompilerParams(
            dimension_semantics=("parallel",),
            vmem_limit_bytes=vmem_limit,
        ),
        cost_estimate=cost,
    )(wbd, expand, *packed)

    out = out.reshape(n_pad, C)               # free reshape back
    if n_pad != N:
        out = out[:N]
    return out


def attention_reference(inputs, weight, bias):
    stacked = jnp.stack(inputs, axis=1)                       # (N, K, C)
    logits = jnp.einsum("nkc,c->nk", stacked, weight[0],
                        precision=jax.lax.Precision.HIGHEST) + bias[0]
    p = jax.nn.softmax(logits, axis=1)                        # (N, K)
    return jnp.einsum("nkc,nk->nc", stacked, p,
                      precision=jax.lax.Precision.HIGHEST)


if __name__ == "__main__":

    def run_case(case_key, N, K, C, tile_rows=None, tol=5e-3):
        k_in, k_w, k_b = jax.random.split(case_key, 3)
        inputs = [
            jax.random.normal(jax.random.fold_in(k_in, i), (N, C),
                              dtype=jnp.float32)
            for i in range(K)
        ]
        bound = 1.0 / (C ** 0.5)
        weight = jax.random.uniform(k_w, (1, C), minval=-bound, maxval=bound,
                                    dtype=jnp.float32)
        bias = jax.random.uniform(k_b, (1,), minval=-bound, maxval=bound,
                                  dtype=jnp.float32)

        out = attention_forward(inputs, weight, bias, tile_rows=tile_rows)
        out = jax.block_until_ready(out)
        ref = attention_reference(inputs, weight, bias)
        assert out.shape == (N, C), (out.shape, (N, C))
        # Exact reciprocal now; tolerance only covers MXU f32-pass rounding.
        err = float(jnp.max(jnp.abs(out - ref)))
        assert jnp.allclose(out, ref, atol=tol, rtol=tol), (
            f"mismatch N={N} K={K} C={C}: max_err={err}")

    # Small shapes consistent with the module: K node-feature views of (N, C).
    run_case(jax.random.PRNGKey(0), N=16, K=3, C=32)
    # N not a multiple of the packing factor g=2 (exercises the < g-row pad).
    run_case(jax.random.PRNGKey(1), N=1001, K=4, C=64)
    # Multi-step grid with a partial last block (cdiv path, masked OOB rows).
    run_case(jax.random.PRNGKey(2), N=1000, K=3, C=64, tile_rows=128)

    print("KERNEL_OK")
</pallas_src>

<mosaic_0001>
module attributes {stable_mosaic.version = 11 : i64} {
  func.func @kernel(%arg0: i32, %arg1: memref<128x4xf32, #tpu.memory_space<vmem>>, %arg2: memref<4x128xf32, #tpu.memory_space<vmem>>, %arg3: memref<4x128xf32, #tpu.memory_space<vmem>>, %arg4: memref<4x128xf32, #tpu.memory_space<vmem>>, %arg5: memref<4x128xf32, #tpu.memory_space<vmem>>, %arg6: memref<4x128xf32, #tpu.memory_space<vmem>>) attributes {dimension_semantics = [#tpu.dimension_semantics<parallel>], iteration_bounds = array<i64: 1>, scalar_prefetch = 0 : i64, scratch_operands = 0 : i64, tpu.core_type = #tpu.core_type<tc>, window_params = [{pipeline_mode = #tpu.pipeline_mode<synchronous>, transform_indices = @transform_0, window_bounds = array<i64: 128, 4>}, {pipeline_mode = #tpu.pipeline_mode<synchronous>, transform_indices = @transform_1, window_bounds = array<i64: 4, 128>}, {transform_indices = @transform_2, window_bounds = array<i64: 4, 128>}, {transform_indices = @transform_3, window_bounds = array<i64: 4, 128>}, {transform_indices = @transform_4, window_bounds = array<i64: 4, 128>}, {transform_indices = @transform_5, window_bounds = array<i64: 4, 128>}]} {
    %c0 = arith.constant 0 : index
    %c0_0 = arith.constant 0 : index
    %0 = vector.load %arg3[%c0, %c0_0] : memref<4x128xf32, #tpu.memory_space<vmem>>, vector<4x128xf32>
    %c0_1 = arith.constant 0 : index
    %c0_2 = arith.constant 0 : index
    %1 = vector.load %arg4[%c0_1, %c0_2] : memref<4x128xf32, #tpu.memory_space<vmem>>, vector<4x128xf32>
    %c0_3 = arith.constant 0 : index
    %c0_4 = arith.constant 0 : index
    %2 = vector.load %arg5[%c0_3, %c0_4] : memref<4x128xf32, #tpu.memory_space<vmem>>, vector<4x128xf32>
    %c0_5 = arith.constant 0 : index
    %c0_6 = arith.constant 0 : index
    %3 = vector.load %arg1[%c0_5, %c0_6] : memref<128x4xf32, #tpu.memory_space<vmem>>, vector<128x4xf32>
    %c0_7 = arith.constant 0 : index
    %c0_8 = arith.constant 0 : index
    %4 = vector.load %arg2[%c0_7, %c0_8] : memref<4x128xf32, #tpu.memory_space<vmem>>, vector<4x128xf32>
    %cst = arith.constant dense<0.000000e+00> : vector<4x4xf32>
    %5 = tpu.matmul %0, %3, %cst {dimension_numbers = #tpu.dot_dimension_numbers<[1], [0], [0], [1], [0, 0, 1, 1], [], []>} : vector<4x128xf32>, vector<128x4xf32>, vector<4x4xf32> -> vector<4x4xf32>
    %cst_9 = arith.constant dense<0.000000e+00> : vector<4x4xf32>
    %6 = tpu.matmul %1, %3, %cst_9 {dimension_numbers = #tpu.dot_dimension_numbers<[1], [0], [0], [1], [0, 0, 1, 1], [], []>} : vector<4x128xf32>, vector<128x4xf32>, vector<4x4xf32> -> vector<4x4xf32>
    %cst_10 = arith.constant dense<0.000000e+00> : vector<4x4xf32>
    %7 = tpu.matmul %2, %3, %cst_10 {dimension_numbers = #tpu.dot_dimension_numbers<[1], [0], [0], [1], [0, 0, 1, 1], [], []>} : vector<4x128xf32>, vector<128x4xf32>, vector<4x4xf32> -> vector<4x4xf32>
    %8 = arith.maximumf %5, %6 : vector<4x4xf32>
    %9 = arith.maximumf %8, %7 : vector<4x4xf32>
    %10 = arith.subf %5, %9 : vector<4x4xf32>
    %11 = math.exp %10 : vector<4x4xf32>
    %12 = arith.subf %6, %9 : vector<4x4xf32>
    %13 = math.exp %12 : vector<4x4xf32>
    %14 = arith.subf %7, %9 : vector<4x4xf32>
    %15 = math.exp %14 : vector<4x4xf32>
    %16 = arith.addf %11, %13 : vector<4x4xf32>
    %17 = arith.addf %16, %15 : vector<4x4xf32>
    %18 = tpu.reciprocal %17 : vector<4x4xf32> -> vector<4x4xf32>
    %19 = arith.mulf %11, %18 : vector<4x4xf32>
    %20 = arith.mulf %13, %18 : vector<4x4xf32>
    %21 = arith.mulf %15, %18 : vector<4x4xf32>
    %cst_11 = arith.constant dense<0.000000e+00> : vector<4x128xf32>
    %22 = tpu.matmul %19, %4, %cst_11 {dimension_numbers = #tpu.dot_dimension_numbers<[1], [0], [0], [1], [0, 0, 1, 1], [], []>} : vector<4x4xf32>, vector<4x128xf32>, vector<4x128xf32> -> vector<4x128xf32>
    %23 = arith.mulf %0, %22 : vector<4x128xf32>
    %cst_12 = arith.constant dense<0.000000e+00> : vector<4x128xf32>
    %24 = tpu.matmul %20, %4, %cst_12 {dimension_numbers = #tpu.dot_dimension_numbers<[1], [0], [0], [1], [0, 0, 1, 1], [], []>} : vector<4x4xf32>, vector<4x128xf32>, vector<4x128xf32> -> vector<4x128xf32>
    %25 = arith.mulf %1, %24 : vector<4x128xf32>
    %26 = arith.addf %23, %25 : vector<4x128xf32>
    %cst_13 = arith.constant dense<0.000000e+00> : vector<4x128xf32>
    %27 = tpu.matmul %21, %4, %cst_13 {dimension_numbers = #tpu.dot_dimension_numbers<[1], [0], [0], [1], [0, 0, 1, 1], [], []>} : vector<4x4xf32>, vector<4x128xf32>, vector<4x128xf32> -> vector<4x128xf32>
    %28 = arith.mulf %2, %27 : vector<4x128xf32>
    %29 = arith.addf %26, %28 : vector<4x128xf32>
    %c0_14 = arith.constant 0 : index
    %c0_15 = arith.constant 0 : index
    %30 = vector.load %arg6[%c0_14, %c0_15] : memref<4x128xf32, #tpu.memory_space<vmem>>, vector<4x128xf32>
    tpu.vector_store %arg6[%c0_14, %c0_15], %29 {strides = array<i32>} : memref<4x128xf32, #tpu.memory_space<vmem>>, vector<4x128xf32>,
    return
  }
  func.func @transform_0(%arg0: i32) -> (i32, i32) {
    %c0_i32 = arith.constant 0 : i32
    %c0_i32_0 = arith.constant 0 : i32
    %c0_i32_1 = arith.constant 0 : i32
    return %c0_i32, %c0_i32_0 : i32, i32
  }
  func.func @transform_1(%arg0: i32) -> (i32, i32) {
    %c0_i32 = arith.constant 0 : i32
    %c0_i32_0 = arith.constant 0 : i32
    %c0_i32_1 = arith.constant 0 : i32
    return %c0_i32, %c0_i32_0 : i32, i32
  }
  func.func @transform_2(%arg0: i32) -> (i32, i32) {
    %c0_i32 = arith.constant 0 : i32
    %c0_i32_0 = arith.constant 0 : i32
    return %arg0, %c0_i32 : i32, i32
  }
  func.func @transform_3(%arg0: i32) -> (i32, i32) {
    %c0_i32 = arith.constant 0 : i32
    %c0_i32_0 = arith.constant 0 : i32
    return %arg0, %c0_i32 : i32, i32
  }
  func.func @transform_4(%arg0: i32) -> (i32, i32) {
    %c0_i32 = arith.constant 0 : i32
    %c0_i32_0 = arith.constant 0 : i32
    return %arg0, %c0_i32 : i32, i32
  }
  func.func @transform_5(%arg0: i32) -> (i32, i32) {
    %c0_i32 = arith.constant 0 : i32
    %c0_i32_0 = arith.constant 0 : i32
    return %arg0, %c0_i32 : i32, i32
  }
}

</mosaic_0001>

<llo_original>
// kernel: tpu_custom_call.1
$region0: #{tpu_custom_call.1}
  #allocation0 [shape = 'u32[]', space=smem, size = 0x4, offset = 0x4, fixed_abs, tag = 'smem constant byte address 0x4 - core index']
  #allocation1 [shape = 'u32[72,128]{1,0:T(1,128)}', space=vmem, size = 0x9000, scoped, tag = 'internal scratch']
  %s0 = inlined_call_operand.vmem [shape: f32[128,4], index: 0, kind: input, shape index: {}]
  %s1 = inlined_call_operand.vmem [shape: f32[4,128], index: 1, kind: input, shape index: {}]
  %s2 = inlined_call_operand.vmem [shape: f32[4,128], index: 2, kind: input, shape index: {}]
  %s3 = inlined_call_operand.vmem [shape: f32[4,128], index: 3, kind: input, shape index: {}]
  %s4 = inlined_call_operand.vmem [shape: f32[4,128], index: 4, kind: input, shape index: {}]
  %s5 = inlined_call_operand.hbm [shape: f32[4,128], index: 5, kind: output, shape index: {}]
  %s6 = sld [smem:[#allocation0]]
  $region30: #{tpu_custom_call.1} parent=0
    _
  %s8 = ssub.s32 1, %s6
  %s9 = scalar_select 0, %s8, %s6
  $region1: #{tpu_custom_call.1} parent=0
    #allocation2 [shape = 'u8[2048]{0}', space=vmem, size = 0x800, scoped, tag = 'output window, operand 0, single buffered']
    #allocation3 [shape = 's32[1]{0}', space=sflag, size = 0x4, scoped, tag = 'scoped memory for tpu_custom_call.1']
    %10 = vsyncpa [#allocation3], 0
    // Predicated region
    $region2: #{tpu_custom_call.1} parent=1 // pred_check
      _
    $region3: #{tpu_custom_call.1} parent=1 // pred_check_branch
      %12 = sbr.rel (0) target = $region5
    $region4: #{tpu_custom_call.1} parent=1 // pred_region
      _
    $region5: #{tpu_custom_call.1} parent=1 // pred_fallthru
      _
    // Predicated region
    $region6: #{tpu_custom_call.1} parent=1 // pred_check
      _
    $region7: #{tpu_custom_call.1} parent=1 // pred_check_branch
      %14 = sbr.rel (0) target = $region9
    $region8: #{tpu_custom_call.1} parent=1 // pred_region
      _
    $region9: #{tpu_custom_call.1} parent=1 // pred_fallthru
      _
    // Predicated region
    $region10: #{tpu_custom_call.1} parent=1 // pred_check
      _
    $region11: #{tpu_custom_call.1} parent=1 // pred_check_branch
      %16 = sbr.rel (0) target = $region13
    $region12: #{tpu_custom_call.1} parent=1 // pred_region
      _
    $region13: #{tpu_custom_call.1} parent=1 // pred_fallthru
      _
    // Predicated region
    $region14: #{tpu_custom_call.1} parent=1 // pred_check
      _
    $region15: #{tpu_custom_call.1} parent=1 // pred_check_branch
      %18 = sbr.rel (0) target = $region17
    $region16: #{tpu_custom_call.1} parent=1 // pred_region
      _
    $region17: #{tpu_custom_call.1} parent=1 // pred_fallthru
      _
    // Predicated region
    $region18: #{tpu_custom_call.1} parent=1 // pred_check
      _
    $region19: #{tpu_custom_call.1} parent=1 // pred_check_branch
      %20 = sbr.rel (0) target = $region21
    $region20: #{tpu_custom_call.1} parent=1 // pred_region
      _
    $region21: #{tpu_custom_call.1} parent=1 // pred_fallthru
      _
    %v21 = vld [vmem:[%s2] sm:$0xf]
    %v22 = vld [vmem:[%s3] sm:$0xf]
    %v23 = vld [vmem:[%s4] sm:$0xf]
    %v24 = vld [vmem:[%s0] sm:$0xff]
    %v25 = vld [vmem:[%s0 + $0x8] sm:$0xff]
    %v26 = vld [vmem:[%s0 + $0x10] sm:$0xff]
    %v27 = vld [vmem:[%s0 + $0x18] sm:$0xff]
    %v28 = vld [vmem:[%s0 + $0x20] sm:$0xff]
    %v29 = vld [vmem:[%s0 + $0x28] sm:$0xff]
    %v30 = vld [vmem:[%s0 + $0x30] sm:$0xff]
    %v31 = vld [vmem:[%s0 + $0x38] sm:$0xff]
    %v32 = vld [vmem:[%s0 + $0x40] sm:$0xff]
    %v33 = vld [vmem:[%s0 + $0x48] sm:$0xff]
    %v34 = vld [vmem:[%s0 + $0x50] sm:$0xff]
    %v35 = vld [vmem:[%s0 + $0x58] sm:$0xff]
    %v36 = vld [vmem:[%s0 + $0x60] sm:$0xff]
    %v37 = vld [vmem:[%s0 + $0x68] sm:$0xff]
    %v38 = vld [vmem:[%s0 + $0x70] sm:$0xff]
    %v39 = vld [vmem:[%s0 + $0x78] sm:$0xff]
    %v40 = vld [vmem:[%s1] sm:$0xf]
    %41 = vmatpush.msra.mxu0 %v39
    %42 = vmatpush.msra.mxu0 %v38
    %43 = vmatpush.msra.mxu0 %v37
    %44 = vmatpush.msra.mxu0 %v36
    %45 = vmatpush.msra.mxu0 %v35
    %46 = vmatpush.msra.mxu0 %v34
    %47 = vmatpush.msra.mxu0 %v33
    %48 = vmatpush.msra.mxu0 %v32
    %49 = vmatpush.msra.mxu0 %v31
    %50 = vmatpush.msra.mxu0 %v30
    %51 = vmatpush.msra.mxu0 %v29
    %52 = vmatpush.msra.mxu0 %v28
    %53 = vmatpush.msra.mxu0 %v27
    %54 = vmatpush.msra.mxu0 %v26
    %55 = vmatpush.msra.mxu0 %v25
    %56 = vmatpush.msra.mxu0 %v24
    %57 = vmatmul.f32.gmra.mxu0 %v21
    %v58 = vpop.f32.mrf.mxu0
    %v59 = vadd.f32 0.0, %v58
    %60 = vdwg.mxu0
    %61 = vmatpush.msra.mxu0 %v39
    %62 = vmatpush.msra.mxu0 %v38
    %63 = vmatpush.msra.mxu0 %v37
    %64 = vmatpush.msra.mxu0 %v36
    %65 = vmatpush.msra.mxu0 %v35
    %66 = vmatpush.msra.mxu0 %v34
    %67 = vmatpush.msra.mxu0 %v33
    %68 = vmatpush.msra.mxu0 %v32
    %69 = vmatpush.msra.mxu0 %v31
    %70 = vmatpush.msra.mxu0 %v30
    %71 = vmatpush.msra.mxu0 %v29
    %72 = vmatpush.msra.mxu0 %v28
    %73 = vmatpush.msra.mxu0 %v27
    %74 = vmatpush.msra.mxu0 %v26
    %75 = vmatpush.msra.mxu0 %v25
    %76 = vmatpush.msra.mxu0 %v24
    %77 = vmatmul.f32.gmra.mxu0 %v22
    %v78 = vpop.f32.mrf.mxu0
    %v79 = vadd.f32 0.0, %v78
    %80 = vdwg.mxu0
    %81 = vmatpush.msra.mxu0 %v39
    %82 = vmatpush.msra.mxu0 %v38
    %83 = vmatpush.msra.mxu0 %v37
    %84 = vmatpush.msra.mxu0 %v36
    %85 = vmatpush.msra.mxu0 %v35
    %86 = vmatpush.msra.mxu0 %v34
    %87 = vmatpush.msra.mxu0 %v33
    %88 = vmatpush.msra.mxu0 %v32
    %89 = vmatpush.msra.mxu0 %v31
    %90 = vmatpush.msra.mxu0 %v30
    %91 = vmatpush.msra.mxu0 %v29
    %92 = vmatpush.msra.mxu0 %v28
    %93 = vmatpush.msra.mxu0 %v27
    %94 = vmatpush.msra.mxu0 %v26
    %95 = vmatpush.msra.mxu0 %v25
    %96 = vmatpush.msra.mxu0 %v24
    %97 = vmatmul.f32.gmra.mxu0 %v23
    %v98 = vpop.f32.mrf.mxu0
    %v99 = vadd.f32 0.0, %v98
    %100 = vdwg.mxu0
    %v101 = vmax.f32 %v59, %v79
    %v102 = vmax.f32 %v101, %v99
    %v103 = vsub.f32 %v59, %v102
    %v104 = vmul.f32 %v103, 1.442695
    %v105 = vpow.pop %v104
    %v106 = vsub.f32 %v79, %v102
    %v107 = vmul.f32 %v106, 1.442695
    %v108 = vpow.pop %v107
    %v109 = vsub.f32 %v99, %v102
    %v110 = vmul.f32 %v109, 1.442695
    %v111 = vpow.pop %v110
    %v112 = vadd.f32 %v105, %v108
    %v113 = vadd.f32 %v112, %v111
    %v114 = vrcp.pop %v113
    %v115 = vmul.f32 %v113, %v114
    %v116 = vsub.f32 1.0, %v115
    %v117 = vmul.f32 %v114, %v116
    %v118 = vadd.f32 %v114, %v117
    %vm119 = vweird.f32 %v113
    %vm120 = vweird.f32 %v114
    %vm121 = vmor %vm119, %vm120
    %v122 = vsel %vm121, %v114, %v118
    %v123 = vand.u32 2147483647, %v113
    %vm124 = vcmp.eq.f32.partialorder %v123, 8.507059e+37
    %v125 = vand.u32 %v113, 2147483648
    %v126 = vor.u32 1.1754944e-38, %v125
    %v127 = vsel %vm124, %v126, %v122
    %v128 = vmul.f32 %v105, %v127
    %v129 = vmul.f32 %v108, %v127
    %v130 = vmul.f32 %v111, %v127
    %vm131 = vcmask 31744
    %v133 = vsel %vm131, %v128, 0
    %vm135 = vcmask 1043456
    %v137 = vsel %vm135, %v40, 0
    %139 = vmatpush.msra.mxu0 0.0
    %140 = vmatpush.msra.mxu0 0.0
    %141 = vmatpush.msra.mxu0 0.0
    %142 = vmatpush.msra.mxu0 0.0
    %143 = vmatpush.msra.mxu0 0.0
    %144 = vmatpush.msra.mxu0 0.0
    %145 = vmatpush.msra.mxu0 0.0
    %146 = vmatpush.msra.mxu0 0.0
    %147 = vmatpush.msra.mxu0 0.0
    %148 = vmatpush.msra.mxu0 0.0
    %149 = vmatpush.msra.mxu0 0.0
    %150 = vmatpush.msra.mxu0 0.0
    %151 = vmatpush.msra.mxu0 0.0
    %152 = vmatpush.msra.mxu0 0.0
    %153 = vmatpush.msra.mxu0 0.0
    %154 = vmatpush.msra.mxu0 %v137
    %155 = vmatmul.f32.gmra.mxu0 %v133
    %v156 = vpop.f32.mrf.mxu0
    %v157 = vadd.f32 0.0, %v156
    %158 = vdwg.mxu0
    %v159 = vmul.f32 %v21, %v157
    %v161 = vsel %vm131, %v129, 0
    %163 = vmatpush.msra.mxu0 0.0
    %164 = vmatpush.msra.mxu0 0.0
    %165 = vmatpush.msra.mxu0 0.0
    %166 = vmatpush.msra.mxu0 0.0
    %167 = vmatpush.msra.mxu0 0.0
    %168 = vmatpush.msra.mxu0 0.0
    %169 = vmatpush.msra.mxu0 0.0
    %170 = vmatpush.msra.mxu0 0.0
    %171 = vmatpush.msra.mxu0 0.0
    %172 = vmatpush.msra.mxu0 0.0
    %173 = vmatpush.msra.mxu0 0.0
    %174 = vmatpush.msra.mxu0 0.0
    %175 = vmatpush.msra.mxu0 0.0
    %176 = vmatpush.msra.mxu0 0.0
    %177 = vmatpush.msra.mxu0 0.0
    %178 = vmatpush.msra.mxu0 %v137
    %179 = vmatmul.f32.gmra.mxu0 %v161
    %v180 = vpop.f32.mrf.mxu0
    %v181 = vadd.f32 0.0, %v180
    %182 = vdwg.mxu0
    %v183 = vmul.f32 %v22, %v181
    %v184 = vadd.f32 %v159, %v183
    %v186 = vsel %vm131, %v130, 0
    %188 = vmatpush.msra.mxu0 0.0
    %189 = vmatpush.msra.mxu0 0.0
    %190 = vmatpush.msra.mxu0 0.0
    %191 = vmatpush.msra.mxu0 0.0
    %192 = vmatpush.msra.mxu0 0.0
    %193 = vmatpush.msra.mxu0 0.0
    %194 = vmatpush.msra.mxu0 0.0
    %195 = vmatpush.msra.mxu0 0.0
    %196 = vmatpush.msra.mxu0 0.0
    %197 = vmatpush.msra.mxu0 0.0
    %198 = vmatpush.msra.mxu0 0.0
    %199 = vmatpush.msra.mxu0 0.0
    %200 = vmatpush.msra.mxu0 0.0
    %201 = vmatpush.msra.mxu0 0.0
    %202 = vmatpush.msra.mxu0 0.0
    %203 = vmatpush.msra.mxu0 %v137
    %204 = vmatmul.f32.gmra.mxu0 %v186
    %v205 = vpop.f32.mrf.mxu0
    %v206 = vadd.f32 0.0, %v205
    %207 = vdwg.mxu0
    %v208 = vmul.f32 %v23, %v206
    %v209 = vadd.f32 %v184, %v208
    %210 = vst [vmem:[#allocation2] sm:$0xf] %v209
    // Predicated region
    $region22: #{tpu_custom_call.1} parent=1 // pred_check
      _
    $region23: #{tpu_custom_call.1} parent=1 // pred_check_branch
      %212 = sbr.rel (0) target = $region25
    $region24: #{tpu_custom_call.1} parent=1 // pred_region
      %214 = vsyncadd [#allocation3], 0
      %s216 = sshll.u32 [#allocation2], 4
      %s217 = int_to_ptr.vmem [resolvable:$true] %s216
      %s218 = sshll.u32 %s5, 4
      %s219 = int_to_ptr.hbm [resolvable:$true] %s218
      %221 = dma.vmem_to_hbm [thread:$0]  %s217, 64, %s219, [#allocation3]
    $region25: #{tpu_custom_call.1} parent=1 // pred_fallthru
      _
    // Predicated region
    $region26: #{tpu_custom_call.1} parent=1 // pred_check
      _
    $region27: #{tpu_custom_call.1} parent=1 // pred_check_branch
      %223 = sbr.rel (0) target = $region29
    $region28: #{tpu_custom_call.1} parent=1 // pred_region
      %225 = dma.done [#allocation3], 64
    $region29: #{tpu_custom_call.1} parent=1 // pred_fallthru
      _
    %226 = vsyncpa [#allocation3], 1

</llo_original>
